<compile_context>
chip_gen: v6e
topology: v6e:2x2x1
jax: 0.10.0
libtpu: 0.0.40
codegen_flags: <defaults>
</compile_context>

<pallas_src>
import functools

import jax
import jax.numpy as jnp
from jax.experimental import pallas as pl
from jax.experimental.pallas import tpu as pltpu

_LANES = 128


def _share_sep_conv_kernel(w_ref, x_ref, out_ref, xpad_ref, *, k, pad):
    # w_ref:    SMEM (k*k,)                 shared filter (scalar reads)
    # x_ref:    VMEM (H, W, Pb)             planes-last input block
    # out_ref:  VMEM (H, W, Pb)             planes-last output block
    # xpad_ref: VMEM (H+2p, W+2p, Pb) f32   scratch with spatial halo
    H, W, Pb = out_ref.shape

    # Build the zero-padded tile in VMEM; cast to f32 exactly once.
    xpad_ref[...] = jnp.zeros_like(xpad_ref)
    xpad_ref[pad:pad + H, pad:pad + W, :] = x_ref[...].astype(jnp.float32)

    # Read the k*k scalar taps from SMEM up front (unrolled loop -> locals).
    w = [w_ref[i] for i in range(k * k)]

    # Shift-and-accumulate over taps.  dy indexes the leading dim (free),
    # dx is a sublane-offset slice, planes stay lane-dense.
    n_acc = min(3, k * k)
    accs = [jnp.zeros((H, W, Pb), jnp.float32) for _ in range(n_acc)]
    t = 0
    for dy in range(k):
        for dx in range(k):
            tap = xpad_ref[dy:dy + H, dx:dx + W, :]
            accs[t % n_acc] = accs[t % n_acc] + w[t] * tap
            t += 1
    acc = accs[0]
    for a in accs[1:]:
        acc = acc + a
    out_ref[...] = acc.astype(out_ref.dtype)


def _round_up(v, m):
    return (v + m - 1) // m * m


def share_sep_conv(x, weight, kernel_size):
    """x: (N, C, H, W).  weight: (1, 1, k, k) shared depthwise filter."""
    N, C, H, W = x.shape
    k = kernel_size
    pad = (k - 1) // 2
    P = N * C

    # --- layout plumbing (plain XLA): planes-last, lane-padded -------------
    P_pad = _round_up(P, _LANES)
    xt = jnp.transpose(x.reshape(P, H, W), (1, 2, 0))       # (H, W, P)
    if P_pad != P:
        xt = jnp.pad(xt, ((0, 0), (0, 0), (0, P_pad - P)))
    w1d = weight.reshape(k * k).astype(jnp.float32)

    # --- block sizing: ~2 MiB f32 input tiles, Pb a multiple of 128 --------
    # (conservative enough for v5e's 16 MiB scoped default and v7x's 64 MiB
    #  physical VMEM once double-buffered in/out + scratch are counted)
    budget_bytes = 2 * 1024 * 1024
    max_pb = max(_LANES, (budget_bytes // (H * W * 4)) // _LANES * _LANES)
    Pb = min(P_pad, max_pb)
    while P_pad % Pb:            # make Pb divide the padded plane count
        Pb -= _LANES
    # TODO(synk): for very large H*W an additional halo'd H grid axis would be
    # needed to keep tiles inside VMEM; unnecessary at these sizes.

    grid = (P_pad // Pb,)
    kernel = functools.partial(_share_sep_conv_kernel, k=k, pad=pad)

    out = pl.pallas_call(
        kernel,
        out_shape=jax.ShapeDtypeStruct((H, W, P_pad), x.dtype),
        grid_spec=pltpu.PrefetchScalarGridSpec(
            num_scalar_prefetch=0,
            grid=grid,
            in_specs=[
                # small shared filter lives in SMEM as a flat 1-D array
                pl.BlockSpec(memory_space=pltpu.MemorySpace.SMEM),
                # a block of planes, full spatial extent, lane-dense last dim
                pl.BlockSpec((H, W, Pb), lambda i: (0, 0, i)),
            ],
            out_specs=pl.BlockSpec((H, W, Pb), lambda i: (0, 0, i)),
            scratch_shapes=[
                pltpu.VMEM((H + 2 * pad, W + 2 * pad, Pb), jnp.float32),
            ],
        ),
        compiler_params=pltpu.CompilerParams(
            dimension_semantics=("parallel",),
            vmem_limit_bytes=32 * 1024 * 1024,
        ),
    )(w1d, xt)

    out = out[:, :, :P]                                      # strip lane pad
    return jnp.transpose(out, (2, 0, 1)).reshape(N, C, H, W)


def make_share_sep_conv_weight(kernel_size):
    """Deterministic init matching the PyTorch module: delta at the center."""
    assert kernel_size % 2 == 1, "kernel size should be odd"
    w = jnp.zeros((1, 1, kernel_size, kernel_size), jnp.float32)
    c = (kernel_size - 1) // 2
    return w.at[0, 0, c, c].set(1.0)


if __name__ == "__main__":
    kernel_size = 3
    N, C, H, W = 2, 4, 16, 16

    key = jax.random.PRNGKey(0)
    x = jax.random.normal(key, (N, C, H, W), dtype=jnp.float32)
    weight = make_share_sep_conv_weight(kernel_size)

    out = jax.block_until_ready(share_sep_conv(x, weight, kernel_size))

    # Sanity 1: with the delta-init weight the op is the identity.
    assert out.shape == (N, C, H, W)
    assert jnp.allclose(out, x, atol=1e-6)

    # Sanity 2: a non-trivial shared filter vs a pure-JAX depthwise conv ref.
    w_rand = jax.random.normal(jax.random.PRNGKey(1),
                               (1, 1, kernel_size, kernel_size),
                               dtype=jnp.float32)
    out2 = jax.block_until_ready(share_sep_conv(x, w_rand, kernel_size))
    pad = (kernel_size - 1) // 2
    ref = jax.lax.conv_general_dilated(
        x, jnp.broadcast_to(w_rand, (C, 1, kernel_size, kernel_size)),
        window_strides=(1, 1),
        padding=[(pad, pad), (pad, pad)],
        feature_group_count=C,
        dimension_numbers=("NCHW", "OIHW", "NCHW"))
    assert jnp.allclose(out2, ref, atol=1e-4), float(jnp.abs(out2 - ref).max())

    print("KERNEL_OK")
</pallas_src>

<mosaic_0001>
module attributes {stable_mosaic.version = 11 : i64} {
  func.func @_share_sep_conv_kernel(%arg0: i32, %arg1: memref<9xf32, #tpu.memory_space<smem>>, %arg2: memref<16x16x128xf32, #tpu.memory_space<vmem>>, %arg3: memref<16x16x128xf32, #tpu.memory_space<vmem>>, %arg4: memref<18x18x128xf32, #tpu.memory_space<vmem>>) attributes {dimension_semantics = [#tpu.dimension_semantics<parallel>], iteration_bounds = array<i64: 1>, scalar_prefetch = 0 : i64, scratch_operands = 1 : i64, tpu.core_type = #tpu.core_type<tc>, window_params = [{transform_indices = @transform_0, window_bounds = array<i64: 9>}, {transform_indices = @transform_1, window_bounds = array<i64: 16, 16, 128>}, {transform_indices = @transform_2, window_bounds = array<i64: 16, 16, 128>}]} {
    %cst = arith.constant 0.000000e+00 : f32
    %0 = vector.broadcast %cst : f32 to vector<18x18x128xf32>
    %c0 = arith.constant 0 : index
    %c0_0 = arith.constant 0 : index
    %c0_1 = arith.constant 0 : index
    %1 = vector.load %arg4[%c0, %c0_0, %c0_1] : memref<18x18x128xf32, #tpu.memory_space<vmem>>, vector<18x18x128xf32>
    tpu.vector_store %arg4[%c0, %c0_0, %c0_1], %0 {strides = array<i32>} : memref<18x18x128xf32, #tpu.memory_space<vmem>>, vector<18x18x128xf32>,
    %c0_2 = arith.constant 0 : index
    %c0_3 = arith.constant 0 : index
    %c0_4 = arith.constant 0 : index
    %2 = vector.load %arg2[%c0_2, %c0_3, %c0_4] : memref<16x16x128xf32, #tpu.memory_space<vmem>>, vector<16x16x128xf32>
    %c1 = arith.constant 1 : index
    %c1_5 = arith.constant 1 : index
    %c0_6 = arith.constant 0 : index
    %3 = vector.load %arg4[%c1, %c1_5, %c0_6] : memref<18x18x128xf32, #tpu.memory_space<vmem>>, vector<16x16x128xf32>
    tpu.vector_store %arg4[%c1, %c1_5, %c0_6], %2 {strides = array<i32>} : memref<18x18x128xf32, #tpu.memory_space<vmem>>, vector<16x16x128xf32>,
    %c0_7 = arith.constant 0 : index
    %4 = memref.load %arg1[%c0_7] : memref<9xf32, #tpu.memory_space<smem>>
    %c1_8 = arith.constant 1 : index
    %5 = memref.load %arg1[%c1_8] : memref<9xf32, #tpu.memory_space<smem>>
    %c2 = arith.constant 2 : index
    %6 = memref.load %arg1[%c2] : memref<9xf32, #tpu.memory_space<smem>>
    %c3 = arith.constant 3 : index
    %7 = memref.load %arg1[%c3] : memref<9xf32, #tpu.memory_space<smem>>
    %c4 = arith.constant 4 : index
    %8 = memref.load %arg1[%c4] : memref<9xf32, #tpu.memory_space<smem>>
    %c5 = arith.constant 5 : index
    %9 = memref.load %arg1[%c5] : memref<9xf32, #tpu.memory_space<smem>>
    %c6 = arith.constant 6 : index
    %10 = memref.load %arg1[%c6] : memref<9xf32, #tpu.memory_space<smem>>
    %c7 = arith.constant 7 : index
    %11 = memref.load %arg1[%c7] : memref<9xf32, #tpu.memory_space<smem>>
    %c8 = arith.constant 8 : index
    %12 = memref.load %arg1[%c8] : memref<9xf32, #tpu.memory_space<smem>>
    %cst_9 = arith.constant 0.000000e+00 : f32
    %13 = vector.broadcast %cst_9 : f32 to vector<16x16x128xf32>
    %cst_10 = arith.constant 0.000000e+00 : f32
    %14 = vector.broadcast %cst_10 : f32 to vector<16x16x128xf32>
    %cst_11 = arith.constant 0.000000e+00 : f32
    %15 = vector.broadcast %cst_11 : f32 to vector<16x16x128xf32>
    %c0_12 = arith.constant 0 : index
    %c0_13 = arith.constant 0 : index
    %c0_14 = arith.constant 0 : index
    %16 = vector.load %arg4[%c0_12, %c0_13, %c0_14] : memref<18x18x128xf32, #tpu.memory_space<vmem>>, vector<16x16x128xf32>
    %17 = vector.broadcast %4 : f32 to vector<16x16x128xf32>
    %18 = arith.mulf %17, %16 : vector<16x16x128xf32>
    %19 = arith.addf %13, %18 : vector<16x16x128xf32>
    %c0_15 = arith.constant 0 : index
    %c1_16 = arith.constant 1 : index
    %c0_17 = arith.constant 0 : index
    %20 = vector.load %arg4[%c0_15, %c1_16, %c0_17] : memref<18x18x128xf32, #tpu.memory_space<vmem>>, vector<16x16x128xf32>
    %21 = vector.broadcast %5 : f32 to vector<16x16x128xf32>
    %22 = arith.mulf %21, %20 : vector<16x16x128xf32>
    %23 = arith.addf %14, %22 : vector<16x16x128xf32>
    %c0_18 = arith.constant 0 : index
    %c2_19 = arith.constant 2 : index
    %c0_20 = arith.constant 0 : index
    %24 = vector.load %arg4[%c0_18, %c2_19, %c0_20] : memref<18x18x128xf32, #tpu.memory_space<vmem>>, vector<16x16x128xf32>
    %25 = vector.broadcast %6 : f32 to vector<16x16x128xf32>
    %26 = arith.mulf %25, %24 : vector<16x16x128xf32>
    %27 = arith.addf %15, %26 : vector<16x16x128xf32>
    %c1_21 = arith.constant 1 : index
    %c0_22 = arith.constant 0 : index
    %c0_23 = arith.constant 0 : index
    %28 = vector.load %arg4[%c1_21, %c0_22, %c0_23] : memref<18x18x128xf32, #tpu.memory_space<vmem>>, vector<16x16x128xf32>
    %29 = vector.broadcast %7 : f32 to vector<16x16x128xf32>
    %30 = arith.mulf %29, %28 : vector<16x16x128xf32>
    %31 = arith.addf %19, %30 : vector<16x16x128xf32>
    %c1_24 = arith.constant 1 : index
    %c1_25 = arith.constant 1 : index
    %c0_26 = arith.constant 0 : index
    %32 = vector.load %arg4[%c1_24, %c1_25, %c0_26] : memref<18x18x128xf32, #tpu.memory_space<vmem>>, vector<16x16x128xf32>
    %33 = vector.broadcast %8 : f32 to vector<16x16x128xf32>
    %34 = arith.mulf %33, %32 : vector<16x16x128xf32>
    %35 = arith.addf %23, %34 : vector<16x16x128xf32>
    %c1_27 = arith.constant 1 : index
    %c2_28 = arith.constant 2 : index
    %c0_29 = arith.constant 0 : index
    %36 = vector.load %arg4[%c1_27, %c2_28, %c0_29] : memref<18x18x128xf32, #tpu.memory_space<vmem>>, vector<16x16x128xf32>
    %37 = vector.broadcast %9 : f32 to vector<16x16x128xf32>
    %38 = arith.mulf %37, %36 : vector<16x16x128xf32>
    %39 = arith.addf %27, %38 : vector<16x16x128xf32>
    %c2_30 = arith.constant 2 : index
    %c0_31 = arith.constant 0 : index
    %c0_32 = arith.constant 0 : index
    %40 = vector.load %arg4[%c2_30, %c0_31, %c0_32] : memref<18x18x128xf32, #tpu.memory_space<vmem>>, vector<16x16x128xf32>
    %41 = vector.broadcast %10 : f32 to vector<16x16x128xf32>
    %42 = arith.mulf %41, %40 : vector<16x16x128xf32>
    %43 = arith.addf %31, %42 : vector<16x16x128xf32>
    %c2_33 = arith.constant 2 : index
    %c1_34 = arith.constant 1 : index
    %c0_35 = arith.constant 0 : index
    %44 = vector.load %arg4[%c2_33, %c1_34, %c0_35] : memref<18x18x128xf32, #tpu.memory_space<vmem>>, vector<16x16x128xf32>
    %45 = vector.broadcast %11 : f32 to vector<16x16x128xf32>
    %46 = arith.mulf %45, %44 : vector<16x16x128xf32>
    %47 = arith.addf %35, %46 : vector<16x16x128xf32>
    %c2_36 = arith.constant 2 : index
    %c2_37 = arith.constant 2 : index
    %c0_38 = arith.constant 0 : index
    %48 = vector.load %arg4[%c2_36, %c2_37, %c0_38] : memref<18x18x128xf32, #tpu.memory_space<vmem>>, vector<16x16x128xf32>
    %49 = vector.broadcast %12 : f32 to vector<16x16x128xf32>
    %50 = arith.mulf %49, %48 : vector<16x16x128xf32>
    %51 = arith.addf %39, %50 : vector<16x16x128xf32>
    %52 = arith.addf %43, %47 : vector<16x16x128xf32>
    %53 = arith.addf %52, %51 : vector<16x16x128xf32>
    %c0_39 = arith.constant 0 : index
    %c0_40 = arith.constant 0 : index
    %c0_41 = arith.constant 0 : index
    %54 = vector.load %arg3[%c0_39, %c0_40, %c0_41] : memref<16x16x128xf32, #tpu.memory_space<vmem>>, vector<16x16x128xf32>
    tpu.vector_store %arg3[%c0_39, %c0_40, %c0_41], %53 {strides = array<i32>} : memref<16x16x128xf32, #tpu.memory_space<vmem>>, vector<16x16x128xf32>,
    return
  }
  func.func @transform_0(%arg0: i32) -> i32 {
    %c0_i32 = arith.constant 0 : i32
    %c0_i32_0 = arith.constant 0 : i32
    return %c0_i32 : i32
  }
  func.func @transform_1(%arg0: i32) -> (i32, i32, i32) {
    %c0_i32 = arith.constant 0 : i32
    %c0_i32_0 = arith.constant 0 : i32
    %c0_i32_1 = arith.constant 0 : i32
    return %c0_i32, %c0_i32_0, %arg0 : i32, i32, i32
  }
  func.func @transform_2(%arg0: i32) -> (i32, i32, i32) {
    %c0_i32 = arith.constant 0 : i32
    %c0_i32_0 = arith.constant 0 : i32
    %c0_i32_1 = arith.constant 0 : i32
    return %c0_i32, %c0_i32_0, %arg0 : i32, i32, i32
  }
}

</mosaic_0001>

<llo_original>
// kernel: tpu_custom_call.1
$region0: #{tpu_custom_call.1}
  #allocation0 [shape = 'u32[]', space=smem, size = 0x4, offset = 0x4, fixed_abs, tag = 'smem constant byte address 0x4 - core index']
  #allocation1 [shape = 'u32[144,128]{1,0:T(1,128)}', space=vmem, size = 0x12000, scoped, tag = 'internal scratch']
  #allocation2 [shape = 'f32[18,18,128]{2,1,0:T(8,128)}', space=vmem, size = 0x36000, scoped, tag = 'scratch operand']
  %s0 = inlined_call_operand.hbm [shape: f32[9], index: 0, kind: input, shape index: {}]
  %s1 = inlined_call_operand.hbm [shape: f32[16,16,128], index: 1, kind: input, shape index: {}]
  %s2 = inlined_call_operand.hbm [shape: f32[16,16,128], index: 2, kind: output, shape index: {}]
  %s3 = sld [smem:[#allocation0]]
  $region26: #{tpu_custom_call.1} parent=0
    _
  %s5 = ssub.s32 1, %s3
  %s6 = scalar_select 0, %s5, %s3
  $region1: #{tpu_custom_call.1} parent=0
    #allocation3 [shape = 'u8[512]{0}', space=smem, size = 0x200, scoped, tag = 'input window, operand 0, single buffered']
    #allocation4 [shape = 's32[1]{0}', space=sflag, size = 0x4, scoped, tag = 'scoped memory for tpu_custom_call.1']
    #allocation5 [shape = 's32[1]{0}', space=sflag, size = 0x4, scoped, tag = 'scoped memory for tpu_custom_call.1']
    #allocation6 [shape = 's32[1]{0}', space=sflag, size = 0x4, scoped, tag = 'scoped memory for tpu_custom_call.1']
    #allocation7 [shape = 'u8[131072]{0}', space=vmem, size = 0x20000, scoped, tag = 'input window, operand 1, single buffered']
    #allocation8 [shape = 'u8[131072]{0}', space=vmem, size = 0x20000, scoped, tag = 'output window, operand 0, single buffered']
    %7 = vsyncpa [#allocation6], 0
    %8 = vsyncpa [#allocation4], 0
    %9 = vsyncpa [#allocation5], 0
    // Predicated region
    $region2: #{tpu_custom_call.1} parent=1 // pred_check
      _
    $region3: #{tpu_custom_call.1} parent=1 // pred_check_branch
      %11 = sbr.rel (0) target = $region5
    $region4: #{tpu_custom_call.1} parent=1 // pred_region
      %s13 = ssub.s32 16, 16
      %14 = vsyncadd [#allocation6], %s13
      %17 = dma.hbm_to_smem %s0, 16, [#allocation3], [#allocation6]
    $region5: #{tpu_custom_call.1} parent=1 // pred_fallthru
      _
    // Predicated region
    $region6: #{tpu_custom_call.1} parent=1 // pred_check
      _
    $region7: #{tpu_custom_call.1} parent=1 // pred_check_branch
      %19 = sbr.rel (0) target = $region9
    $region8: #{tpu_custom_call.1} parent=1 // pred_region
      %s21 = ssub.s32 4096, 4096
      %22 = vsyncadd [#allocation4], %s21
      %s23 = sshll.u32 [#allocation7], 4
      %s24 = int_to_ptr.vmem [resolvable:$true] %s23
      %29 = dma.hbm_to_vmem [thread:$0]  %s1, 4096, %s24, [#allocation4], 128, 128, 8
    $region9: #{tpu_custom_call.1} parent=1 // pred_fallthru
      _
    // Predicated region
    $region10: #{tpu_custom_call.1} parent=1 // pred_check
      _
    $region11: #{tpu_custom_call.1} parent=1 // pred_check_branch
      %31 = sbr.rel (0) target = $region13
    $region12: #{tpu_custom_call.1} parent=1 // pred_region
      %32 = dma.done [#allocation6], 16
    $region13: #{tpu_custom_call.1} parent=1 // pred_fallthru
      _
    // Predicated region
    $region14: #{tpu_custom_call.1} parent=1 // pred_check
      _
    $region15: #{tpu_custom_call.1} parent=1 // pred_check_branch
      %34 = sbr.rel (0) target = $region17
    $region16: #{tpu_custom_call.1} parent=1 // pred_region
      %35 = dma.done [#allocation4], 4096
    $region17: #{tpu_custom_call.1} parent=1 // pred_fallthru
      _
    %36 = sfence
    %37 = vst [vmem:[#allocation2] sm:$0xff] 0.0
    %38 = vst [vmem:[#allocation2 + $0x8] sm:$0xff] 0.0
    %39 = vst [vmem:[#allocation2 + $0x10] sm:$0x3] 0.0
    %40 = vst [vmem:[#allocation2 + $0x18] sm:$0xff] 0.0
    %41 = vst [vmem:[#allocation2 + $0x20] sm:$0xff] 0.0
    %42 = vst [vmem:[#allocation2 + $0x28] sm:$0x3] 0.0
    %43 = vst [vmem:[#allocation2 + $0x30] sm:$0xff] 0.0
    %44 = vst [vmem:[#allocation2 + $0x38] sm:$0xff] 0.0
    %45 = vst [vmem:[#allocation2 + $0x40] sm:$0x3] 0.0
    %46 = vst [vmem:[#allocation2 + $0x48] sm:$0xff] 0.0
    %47 = vst [vmem:[#allocation2 + $0x50] sm:$0xff] 0.0
    %48 = vst [vmem:[#allocation2 + $0x58] sm:$0x3] 0.0
    %49 = vst [vmem:[#allocation2 + $0x60] sm:$0xff] 0.0
    %50 = vst [vmem:[#allocation2 + $0x68] sm:$0xff] 0.0
    %51 = vst [vmem:[#allocation2 + $0x70] sm:$0x3] 0.0
    %52 = vst [vmem:[#allocation2 + $0x78] sm:$0xff] 0.0
    %53 = vst [vmem:[#allocation2 + $0x80] sm:$0xff] 0.0
    %54 = vst [vmem:[#allocation2 + $0x88] sm:$0x3] 0.0
    %55 = vst [vmem:[#allocation2 + $0x90] sm:$0xff] 0.0
    %56 = vst [vmem:[#allocation2 + $0x98] sm:$0xff] 0.0
    %57 = vst [vmem:[#allocation2 + $0xa0] sm:$0x3] 0.0
    %58 = vst [vmem:[#allocation2 + $0xa8] sm:$0xff] 0.0
    %59 = vst [vmem:[#allocation2 + $0xb0] sm:$0xff] 0.0
    %60 = vst [vmem:[#allocation2 + $0xb8] sm:$0x3] 0.0
    %61 = vst [vmem:[#allocation2 + $0xc0] sm:$0xff] 0.0
    %62 = vst [vmem:[#allocation2 + $0xc8] sm:$0xff] 0.0
    %63 = vst [vmem:[#allocation2 + $0xd0] sm:$0x3] 0.0
    %64 = vst [vmem:[#allocation2 + $0xd8] sm:$0xff] 0.0
    %65 = vst [vmem:[#allocation2 + $0xe0] sm:$0xff] 0.0
    %66 = vst [vmem:[#allocation2 + $0xe8] sm:$0x3] 0.0
    %67 = vst [vmem:[#allocation2 + $0xf0] sm:$0xff] 0.0
    %68 = vst [vmem:[#allocation2 + $0xf8] sm:$0xff] 0.0
    %69 = vst [vmem:[#allocation2 + $0x100] sm:$0x3] 0.0
    %70 = vst [vmem:[#allocation2 + $0x108] sm:$0xff] 0.0
    %71 = vst [vmem:[#allocation2 + $0x110] sm:$0xff] 0.0
    %72 = vst [vmem:[#allocation2 + $0x118] sm:$0x3] 0.0
    %73 = vst [vmem:[#allocation2 + $0x120] sm:$0xff] 0.0
    %74 = vst [vmem:[#allocation2 + $0x128] sm:$0xff] 0.0
    %75 = vst [vmem:[#allocation2 + $0x130] sm:$0x3] 0.0
    %76 = vst [vmem:[#allocation2 + $0x138] sm:$0xff] 0.0
    %77 = vst [vmem:[#allocation2 + $0x140] sm:$0xff] 0.0
    %78 = vst [vmem:[#allocation2 + $0x148] sm:$0x3] 0.0
    %79 = vst [vmem:[#allocation2 + $0x150] sm:$0xff] 0.0
    %80 = vst [vmem:[#allocation2 + $0x158] sm:$0xff] 0.0
    %81 = vst [vmem:[#allocation2 + $0x160] sm:$0x3] 0.0
    %82 = vst [vmem:[#allocation2 + $0x168] sm:$0xff] 0.0
    %83 = vst [vmem:[#allocation2 + $0x170] sm:$0xff] 0.0
    %84 = vst [vmem:[#allocation2 + $0x178] sm:$0x3] 0.0
    %85 = vst [vmem:[#allocation2 + $0x180] sm:$0xff] 0.0
    %86 = vst [vmem:[#allocation2 + $0x188] sm:$0xff] 0.0
    %87 = vst [vmem:[#allocation2 + $0x190] sm:$0x3] 0.0
    %88 = vst [vmem:[#allocation2 + $0x198] sm:$0xff] 0.0
    %89 = vst [vmem:[#allocation2 + $0x1a0] sm:$0xff] 0.0
    %90 = vst [vmem:[#allocation2 + $0x1a8] sm:$0x3] 0.0
    %v91 = vld [vmem:[#allocation7] sm:$0xff]
    %v92 = vld [vmem:[#allocation7 + $0x8] sm:$0xff]
    %v93 = vld [vmem:[#allocation7 + $0x10] sm:$0xff]
    %v94 = vld [vmem:[#allocation7 + $0x18] sm:$0xff]
    %v95 = vld [vmem:[#allocation7 + $0x20] sm:$0xff]
    %v96 = vld [vmem:[#allocation7 + $0x28] sm:$0xff]
    %v97 = vld [vmem:[#allocation7 + $0x30] sm:$0xff]
    %v98 = vld [vmem:[#allocation7 + $0x38] sm:$0xff]
    %v99 = vld [vmem:[#allocation7 + $0x40] sm:$0xff]
    %v100 = vld [vmem:[#allocation7 + $0x48] sm:$0xff]
    %v101 = vld [vmem:[#allocation7 + $0x50] sm:$0xff]
    %v102 = vld [vmem:[#allocation7 + $0x58] sm:$0xff]
    %v103 = vld [vmem:[#allocation7 + $0x60] sm:$0xff]
    %v104 = vld [vmem:[#allocation7 + $0x68] sm:$0xff]
    %v105 = vld [vmem:[#allocation7 + $0x70] sm:$0xff]
    %v106 = vld [vmem:[#allocation7 + $0x78] sm:$0xff]
    %v107 = vld [vmem:[#allocation7 + $0x80] sm:$0xff]
    %v108 = vld [vmem:[#allocation7 + $0x88] sm:$0xff]
    %v109 = vld [vmem:[#allocation7 + $0x90] sm:$0xff]
    %v110 = vld [vmem:[#allocation7 + $0x98] sm:$0xff]
    %v111 = vld [vmem:[#allocation7 + $0xa0] sm:$0xff]
    %v112 = vld [vmem:[#allocation7 + $0xa8] sm:$0xff]
    %v113 = vld [vmem:[#allocation7 + $0xb0] sm:$0xff]
    %v114 = vld [vmem:[#allocation7 + $0xb8] sm:$0xff]
    %v115 = vld [vmem:[#allocation7 + $0xc0] sm:$0xff]
    %v116 = vld [vmem:[#allocation7 + $0xc8] sm:$0xff]
    %v117 = vld [vmem:[#allocation7 + $0xd0] sm:$0xff]
    %v118 = vld [vmem:[#allocation7 + $0xd8] sm:$0xff]
    %v119 = vld [vmem:[#allocation7 + $0xe0] sm:$0xff]
    %v120 = vld [vmem:[#allocation7 + $0xe8] sm:$0xff]
    %v121 = vld [vmem:[#allocation7 + $0xf0] sm:$0xff]
    %v122 = vld [vmem:[#allocation7 + $0xf8] sm:$0xff]
    %s123 = scalar_lea.vmem [#allocation2], 24
    %124 = vst [vmem:[%s123 + $0x1] sm:$0xff] %v91
    %125 = vst [vmem:[%s123 + $0x9] sm:$0xff] %v92
    %126 = vst [vmem:[%s123 + $0x19] sm:$0xff] %v93
    %127 = vst [vmem:[%s123 + $0x21] sm:$0xff] %v94
    %128 = vst [vmem:[%s123 + $0x31] sm:$0xff] %v95
    %129 = vst [vmem:[%s123 + $0x39] sm:$0xff] %v96
    %130 = vst [vmem:[%s123 + $0x49] sm:$0xff] %v97
    %131 = vst [vmem:[%s123 + $0x51] sm:$0xff] %v98
    %132 = vst [vmem:[%s123 + $0x61] sm:$0xff] %v99
    %133 = vst [vmem:[%s123 + $0x69] sm:$0xff] %v100
    %134 = vst [vmem:[%s123 + $0x79] sm:$0xff] %v101
    %135 = vst [vmem:[%s123 + $0x81] sm:$0xff] %v102
    %136 = vst [vmem:[%s123 + $0x91] sm:$0xff] %v103
    %137 = vst [vmem:[%s123 + $0x99] sm:$0xff] %v104
    %138 = vst [vmem:[%s123 + $0xa9] sm:$0xff] %v105
    %139 = vst [vmem:[%s123 + $0xb1] sm:$0xff] %v106
    %140 = vst [vmem:[%s123 + $0xc1] sm:$0xff] %v107
    %141 = vst [vmem:[%s123 + $0xc9] sm:$0xff] %v108
    %142 = vst [vmem:[%s123 + $0xd9] sm:$0xff] %v109
    %143 = vst [vmem:[%s123 + $0xe1] sm:$0xff] %v110
    %144 = vst [vmem:[%s123 + $0xf1] sm:$0xff] %v111
    %145 = vst [vmem:[%s123 + $0xf9] sm:$0xff] %v112
    %146 = vst [vmem:[%s123 + $0x109] sm:$0xff] %v113
    %147 = vst [vmem:[%s123 + $0x111] sm:$0xff] %v114
    %148 = vst [vmem:[%s123 + $0x121] sm:$0xff] %v115
    %149 = vst [vmem:[%s123 + $0x129] sm:$0xff] %v116
    %150 = vst [vmem:[%s123 + $0x139] sm:$0xff] %v117
    %151 = vst [vmem:[%s123 + $0x141] sm:$0xff] %v118
    %152 = vst [vmem:[%s123 + $0x151] sm:$0xff] %v119
    %153 = vst [vmem:[%s123 + $0x159] sm:$0xff] %v120
    %154 = vst [vmem:[%s123 + $0x169] sm:$0xff] %v121
    %155 = vst [vmem:[%s123 + $0x171] sm:$0xff] %v122
    %s156 = sld [smem:[#allocation3]]
    %s157 = sld [smem:[#allocation3 + $0x1]]
    %s158 = sld [smem:[#allocation3 + $0x2]]
    %s159 = sld [smem:[#allocation3 + $0x3]]
    %s160 = sld [smem:[#allocation3 + $0x4]]
    %s161 = sld [smem:[#allocation3 + $0x5]]
    %s162 = sld [smem:[#allocation3 + $0x6]]
    %s163 = sld [smem:[#allocation3 + $0x7]]
    %s164 = sld [smem:[#allocation3 + $0x8]]
    %v165 = vld [vmem:[#allocation2] sm:$0xff]
    %v166 = vld [vmem:[#allocation2 + $0x8] sm:$0xff]
    %v167 = vld [vmem:[#allocation2 + $0x18] sm:$0xff]
    %v168 = vld [vmem:[#allocation2 + $0x20] sm:$0xff]
    %v169 = vld [vmem:[#allocation2 + $0x30] sm:$0xff]
    %v170 = vld [vmem:[#allocation2 + $0x38] sm:$0xff]
    %v171 = vld [vmem:[#allocation2 + $0x48] sm:$0xff]
    %v172 = vld [vmem:[#allocation2 + $0x50] sm:$0xff]
    %v173 = vld [vmem:[#allocation2 + $0x60] sm:$0xff]
    %v174 = vld [vmem:[#allocation2 + $0x68] sm:$0xff]
    %v175 = vld [vmem:[#allocation2 + $0x78] sm:$0xff]
    %v176 = vld [vmem:[#allocation2 + $0x80] sm:$0xff]
    %v177 = vld [vmem:[#allocation2 + $0x90] sm:$0xff]
    %v178 = vld [vmem:[#allocation2 + $0x98] sm:$0xff]
    %v179 = vld [vmem:[#allocation2 + $0xa8] sm:$0xff]
    %v180 = vld [vmem:[#allocation2 + $0xb0] sm:$0xff]
    %v181 = vld [vmem:[#allocation2 + $0xc0] sm:$0xff]
    %v182 = vld [vmem:[#allocation2 + $0xc8] sm:$0xff]
    %v183 = vld [vmem:[#allocation2 + $0xd8] sm:$0xff]
    %v184 = vld [vmem:[#allocation2 + $0xe0] sm:$0xff]
    %v185 = vld [vmem:[#allocation2 + $0xf0] sm:$0xff]
    %v186 = vld [vmem:[#allocation2 + $0xf8] sm:$0xff]
    %v187 = vld [vmem:[#allocation2 + $0x108] sm:$0xff]
    %v188 = vld [vmem:[#allocation2 + $0x110] sm:$0xff]
    %v189 = vld [vmem:[#allocation2 + $0x120] sm:$0xff]
    %v190 = vld [vmem:[#allocation2 + $0x128] sm:$0xff]
    %v191 = vld [vmem:[#allocation2 + $0x138] sm:$0xff]
    %v192 = vld [vmem:[#allocation2 + $0x140] sm:$0xff]
    %v193 = vld [vmem:[#allocation2 + $0x150] sm:$0xff]
    %v194 = vld [vmem:[#allocation2 + $0x158] sm:$0xff]
    %v195 = vld [vmem:[#allocation2 + $0x168] sm:$0xff]
    %v196 = vld [vmem:[#allocation2 + $0x170] sm:$0xff]
    %v197 = vstv %s156
    %v198 = vmul.f32 %v197, %v165
    %v199 = vmul.f32 %v197, %v166
    %v200 = vmul.f32 %v197, %v167
    %v201 = vmul.f32 %v197, %v168
    %v202 = vmul.f32 %v197, %v169
    %v203 = vmul.f32 %v197, %v170
    %v204 = vmul.f32 %v197, %v171
    %v205 = vmul.f32 %v197, %v172
    %v206 = vmul.f32 %v197, %v173
    %v207 = vmul.f32 %v197, %v174
    %v208 = vmul.f32 %v197, %v175
    %v209 = vmul.f32 %v197, %v176
    %v210 = vmul.f32 %v197, %v177
    %v211 = vmul.f32 %v197, %v178
    %v212 = vmul.f32 %v197, %v179
    %v213 = vmul.f32 %v197, %v180
    %v214 = vmul.f32 %v197, %v181
    %v215 = vmul.f32 %v197, %v182
    %v216 = vmul.f32 %v197, %v183
    %v217 = vmul.f32 %v197, %v184
    %v218 = vmul.f32 %v197, %v185
    %v219 = vmul.f32 %v197, %v186
    %v220 = vmul.f32 %v197, %v187
    %v221 = vmul.f32 %v197, %v188
    %v222 = vmul.f32 %v197, %v189
    %v223 = vmul.f32 %v197, %v190
    %v224 = vmul.f32 %v197, %v191
    %v225 = vmul.f32 %v197, %v192
    %v226 = vmul.f32 %v197, %v193
    %v227 = vmul.f32 %v197, %v194
    %v228 = vmul.f32 %v197, %v195
    %v229 = vmul.f32 %v197, %v196
    %v230 = vadd.f32 %v198, 0.0
    %v231 = vadd.f32 %v199, 0.0
    %v232 = vadd.f32 %v200, 0.0
    %v233 = vadd.f32 %v201, 0.0
    %v234 = vadd.f32 %v202, 0.0
    %v235 = vadd.f32 %v203, 0.0
    %v236 = vadd.f32 %v204, 0.0
    %v237 = vadd.f32 %v205, 0.0
    %v238 = vadd.f32 %v206, 0.0
    %v239 = vadd.f32 %v207, 0.0
    %v240 = vadd.f32 %v208, 0.0
    %v241 = vadd.f32 %v209, 0.0
    %v242 = vadd.f32 %v210, 0.0
    %v243 = vadd.f32 %v211, 0.0
    %v244 = vadd.f32 %v212, 0.0
    %v245 = vadd.f32 %v213, 0.0
    %v246 = vadd.f32 %v214, 0.0
    %v247 = vadd.f32 %v215, 0.0
    %v248 = vadd.f32 %v216, 0.0
    %v249 = vadd.f32 %v217, 0.0
    %v250 = vadd.f32 %v218, 0.0
    %v251 = vadd.f32 %v219, 0.0
    %v252 = vadd.f32 %v220, 0.0
    %v253 = vadd.f32 %v221, 0.0
    %v254 = vadd.f32 %v222, 0.0
    %v255 = vadd.f32 %v223, 0.0
    %v256 = vadd.f32 %v224, 0.0
    %v257 = vadd.f32 %v225, 0.0
    %v258 = vadd.f32 %v226, 0.0
    %v259 = vadd.f32 %v227, 0.0
    %v260 = vadd.f32 %v228, 0.0
    %v261 = vadd.f32 %v229, 0.0
    %v262 = vld [vmem:[#allocation2 + $0x1] sm:$0xff]
    %v263 = vld [vmem:[#allocation2 + $0x9] sm:$0xff]
    %v264 = vld [vmem:[#allocation2 + $0x19] sm:$0xff]
    %v265 = vld [vmem:[#allocation2 + $0x21] sm:$0xff]
    %v266 = vld [vmem:[#allocation2 + $0x31] sm:$0xff]
    %v267 = vld [vmem:[#allocation2 + $0x39] sm:$0xff]
    %v268 = vld [vmem:[#allocation2 + $0x49] sm:$0xff]
    %v269 = vld [vmem:[#allocation2 + $0x51] sm:$0xff]
    %v270 = vld [vmem:[#allocation2 + $0x61] sm:$0xff]
    %v271 = vld [vmem:[#allocation2 + $0x69] sm:$0xff]
    %v272 = vld [vmem:[#allocation2 + $0x79] sm:$0xff]
    %v273 = vld [vmem:[#allocation2 + $0x81] sm:$0xff]
    %v274 = vld [vmem:[#allocation2 + $0x91] sm:$0xff]
    %v275 = vld [vmem:[#allocation2 + $0x99] sm:$0xff]
    %v276 = vld [vmem:[#allocation2 + $0xa9] sm:$0xff]
    %v277 = vld [vmem:[#allocation2 + $0xb1] sm:$0xff]
    %v278 = vld [vmem:[#allocation2 + $0xc1] sm:$0xff]
    %v279 = vld [vmem:[#allocation2 + $0xc9] sm:$0xff]
    %v280 = vld [vmem:[#allocation2 + $0xd9] sm:$0xff]
    %v281 = vld [vmem:[#allocation2 + $0xe1] sm:$0xff]
    %v282 = vld [vmem:[#allocation2 + $0xf1] sm:$0xff]
    %v283 = vld [vmem:[#allocation2 + $0xf9] sm:$0xff]
    %v284 = vld [vmem:[#allocation2 + $0x109] sm:$0xff]
    %v285 = vld [vmem:[#allocation2 + $0x111] sm:$0xff]
    %v286 = vld [vmem:[#allocation2 + $0x121] sm:$0xff]
    %v287 = vld [vmem:[#allocation2 + $0x129] sm:$0xff]
    %v288 = vld [vmem:[#allocation2 + $0x139] sm:$0xff]
    %v289 = vld [vmem:[#allocation2 + $0x141] sm:$0xff]
    %v290 = vld [vmem:[#allocation2 + $0x151] sm:$0xff]
    %v291 = vld [vmem:[#allocation2 + $0x159] sm:$0xff]
    %v292 = vld [vmem:[#allocation2 + $0x169] sm:$0xff]
    %v293 = vld [vmem:[#allocation2 + $0x171] sm:$0xff]
    %v294 = vstv %s157
    %v295 = vmul.f32 %v294, %v262
    %v296 = vmul.f32 %v294, %v263
    %v297 = vmul.f32 %v294, %v264
    %v298 = vmul.f32 %v294, %v265
    %v299 = vmul.f32 %v294, %v266
    %v300 = vmul.f32 %v294, %v267
    %v301 = vmul.f32 %v294, %v268
    %v302 = vmul.f32 %v294, %v269
    %v303 = vmul.f32 %v294, %v270
    %v304 = vmul.f32 %v294, %v271
    %v305 = vmul.f32 %v294, %v272
    %v306 = vmul.f32 %v294, %v273
    %v307 = vmul.f32 %v294, %v274
    %v308 = vmul.f32 %v294, %v275
    %v309 = vmul.f32 %v294, %v276
    %v310 = vmul.f32 %v294, %v277
    %v311 = vmul.f32 %v294, %v278
    %v312 = vmul.f32 %v294, %v279
    %v313 = vmul.f32 %v294, %v280
    %v314 = vmul.f32 %v294, %v281
    %v315 = vmul.f32 %v294, %v282
    %v316 = vmul.f32 %v294, %v283
    %v317 = vmul.f32 %v294, %v284
    %v318 = vmul.f32 %v294, %v285
    %v319 = vmul.f32 %v294, %v286
    %v320 = vmul.f32 %v294, %v287
    %v321 = vmul.f32 %v294, %v288
    %v322 = vmul.f32 %v294, %v289
    %v323 = vmul.f32 %v294, %v290
    %v324 = vmul.f32 %v294, %v291
    %v325 = vmul.f32 %v294, %v292
    %v326 = vmul.f32 %v294, %v293
    %v327 = vadd.f32 %v295, 0.0
    %v328 = vadd.f32 %v296, 0.0
    %v329 = vadd.f32 %v297, 0.0
    %v330 = vadd.f32 %v298, 0.0
    %v331 = vadd.f32 %v299, 0.0
    %v332 = vadd.f32 %v300, 0.0
    %v333 = vadd.f32 %v301, 0.0
    %v334 = vadd.f32 %v302, 0.0
    %v335 = vadd.f32 %v303, 0.0
    %v336 = vadd.f32 %v304, 0.0
    %v337 = vadd.f32 %v305, 0.0
    %v338 = vadd.f32 %v306, 0.0
    %v339 = vadd.f32 %v307, 0.0
    %v340 = vadd.f32 %v308, 0.0
    %v341 = vadd.f32 %v309, 0.0
    %v342 = vadd.f32 %v310, 0.0
    %v343 = vadd.f32 %v311, 0.0
    %v344 = vadd.f32 %v312, 0.0
    %v345 = vadd.f32 %v313, 0.0
    %v346 = vadd.f32 %v314, 0.0
    %v347 = vadd.f32 %v315, 0.0
    %v348 = vadd.f32 %v316, 0.0
    %v349 = vadd.f32 %v317, 0.0
    %v350 = vadd.f32 %v318, 0.0
    %v351 = vadd.f32 %v319, 0.0
    %v352 = vadd.f32 %v320, 0.0
    %v353 = vadd.f32 %v321, 0.0
    %v354 = vadd.f32 %v322, 0.0
    %v355 = vadd.f32 %v323, 0.0
    %v356 = vadd.f32 %v324, 0.0
    %v357 = vadd.f32 %v325, 0.0
    %v358 = vadd.f32 %v326, 0.0
    %v359 = vld [vmem:[#allocation2 + $0x2] sm:$0xff]
    %v360 = vld [vmem:[#allocation2 + $0xa] sm:$0xff]
    %v361 = vld [vmem:[#allocation2 + $0x1a] sm:$0xff]
    %v362 = vld [vmem:[#allocation2 + $0x22] sm:$0xff]
    %v363 = vld [vmem:[#allocation2 + $0x32] sm:$0xff]
    %v364 = vld [vmem:[#allocation2 + $0x3a] sm:$0xff]
    %v365 = vld [vmem:[#allocation2 + $0x4a] sm:$0xff]
    %v366 = vld [vmem:[#allocation2 + $0x52] sm:$0xff]
    %v367 = vld [vmem:[#allocation2 + $0x62] sm:$0xff]
    %v368 = vld [vmem:[#allocation2 + $0x6a] sm:$0xff]
    %v369 = vld [vmem:[#allocation2 + $0x7a] sm:$0xff]
    %v370 = vld [vmem:[#allocation2 + $0x82] sm:$0xff]
    %v371 = vld [vmem:[#allocation2 + $0x92] sm:$0xff]
    %v372 = vld [vmem:[#allocation2 + $0x9a] sm:$0xff]
    %v373 = vld [vmem:[#allocation2 + $0xaa] sm:$0xff]
    %v374 = vld [vmem:[#allocation2 + $0xb2] sm:$0xff]
    %v375 = vld [vmem:[#allocation2 + $0xc2] sm:$0xff]
    %v376 = vld [vmem:[#allocation2 + $0xca] sm:$0xff]
    %v377 = vld [vmem:[#allocation2 + $0xda] sm:$0xff]
    %v378 = vld [vmem:[#allocation2 + $0xe2] sm:$0xff]
    %v379 = vld [vmem:[#allocation2 + $0xf2] sm:$0xff]
    %v380 = vld [vmem:[#allocation2 + $0xfa] sm:$0xff]
    %v381 = vld [vmem:[#allocation2 + $0x10a] sm:$0xff]
    %v382 = vld [vmem:[#allocation2 + $0x112] sm:$0xff]
    %v383 = vld [vmem:[#allocation2 + $0x122] sm:$0xff]
    %v384 = vld [vmem:[#allocation2 + $0x12a] sm:$0xff]
    %v385 = vld [vmem:[#allocation2 + $0x13a] sm:$0xff]
    %v386 = vld [vmem:[#allocation2 + $0x142] sm:$0xff]
    %v387 = vld [vmem:[#allocation2 + $0x152] sm:$0xff]
    %v388 = vld [vmem:[#allocation2 + $0x15a] sm:$0xff]
    %v389 = vld [vmem:[#allocation2 + $0x16a] sm:$0xff]
    %v390 = vld [vmem:[#allocation2 + $0x172] sm:$0xff]
    %v391 = vstv %s158
    %v392 = vmul.f32 %v391, %v359
    %v393 = vmul.f32 %v391, %v360
    %v394 = vmul.f32 %v391, %v361
    %v395 = vmul.f32 %v391, %v362
    %v396 = vmul.f32 %v391, %v363
    %v397 = vmul.f32 %v391, %v364
    %v398 = vmul.f32 %v391, %v365
    %v399 = vmul.f32 %v391, %v366
    %v400 = vmul.f32 %v391, %v367
    %v401 = vmul.f32 %v391, %v368
    %v402 = vmul.f32 %v391, %v369
    %v403 = vmul.f32 %v391, %v370
    %v404 = vmul.f32 %v391, %v371
    %v405 = vmul.f32 %v391, %v372
    %v406 = vmul.f32 %v391, %v373
    %v407 = vmul.f32 %v391, %v374
    %v408 = vmul.f32 %v391, %v375
    %v409 = vmul.f32 %v391, %v376
    %v410 = vmul.f32 %v391, %v377
    %v411 = vmul.f32 %v391, %v378
    %v412 = vmul.f32 %v391, %v379
    %v413 = vmul.f32 %v391, %v380
    %v414 = vmul.f32 %v391, %v381
    %v415 = vmul.f32 %v391, %v382
    %v416 = vmul.f32 %v391, %v383
    %v417 = vmul.f32 %v391, %v384
    %v418 = vmul.f32 %v391, %v385
    %v419 = vmul.f32 %v391, %v386
    %v420 = vmul.f32 %v391, %v387
    %v421 = vmul.f32 %v391, %v388
    %v422 = vmul.f32 %v391, %v389
    %v423 = vmul.f32 %v391, %v390
    %v424 = vadd.f32 %v392, 0.0
    %v425 = vadd.f32 %v393, 0.0
    %v426 = vadd.f32 %v394, 0.0
    %v427 = vadd.f32 %v395, 0.0
    %v428 = vadd.f32 %v396, 0.0
    %v429 = vadd.f32 %v397, 0.0
    %v430 = vadd.f32 %v398, 0.0
    %v431 = vadd.f32 %v399, 0.0
    %v432 = vadd.f32 %v400, 0.0
    %v433 = vadd.f32 %v401, 0.0
    %v434 = vadd.f32 %v402, 0.0
    %v435 = vadd.f32 %v403, 0.0
    %v436 = vadd.f32 %v404, 0.0
    %v437 = vadd.f32 %v405, 0.0
    %v438 = vadd.f32 %v406, 0.0
    %v439 = vadd.f32 %v407, 0.0
    %v440 = vadd.f32 %v408, 0.0
    %v441 = vadd.f32 %v409, 0.0
    %v442 = vadd.f32 %v410, 0.0
    %v443 = vadd.f32 %v411, 0.0
    %v444 = vadd.f32 %v412, 0.0
    %v445 = vadd.f32 %v413, 0.0
    %v446 = vadd.f32 %v414, 0.0
    %v447 = vadd.f32 %v415, 0.0
    %v448 = vadd.f32 %v416, 0.0
    %v449 = vadd.f32 %v417, 0.0
    %v450 = vadd.f32 %v418, 0.0
    %v451 = vadd.f32 %v419, 0.0
    %v452 = vadd.f32 %v420, 0.0
    %v453 = vadd.f32 %v421, 0.0
    %v454 = vadd.f32 %v422, 0.0
    %v455 = vadd.f32 %v423, 0.0
    %v456 = vld [vmem:[%s123] sm:$0xff]
    %v457 = vld [vmem:[%s123 + $0x8] sm:$0xff]
    %v458 = vld [vmem:[%s123 + $0x18] sm:$0xff]
    %v459 = vld [vmem:[%s123 + $0x20] sm:$0xff]
    %v460 = vld [vmem:[%s123 + $0x30] sm:$0xff]
    %v461 = vld [vmem:[%s123 + $0x38] sm:$0xff]
    %v462 = vld [vmem:[%s123 + $0x48] sm:$0xff]
    %v463 = vld [vmem:[%s123 + $0x50] sm:$0xff]
    %v464 = vld [vmem:[%s123 + $0x60] sm:$0xff]
    %v465 = vld [vmem:[%s123 + $0x68] sm:$0xff]
    %v466 = vld [vmem:[%s123 + $0x78] sm:$0xff]
    %v467 = vld [vmem:[%s123 + $0x80] sm:$0xff]
    %v468 = vld [vmem:[%s123 + $0x90] sm:$0xff]
    %v469 = vld [vmem:[%s123 + $0x98] sm:$0xff]
    %v470 = vld [vmem:[%s123 + $0xa8] sm:$0xff]
    %v471 = vld [vmem:[%s123 + $0xb0] sm:$0xff]
    %v472 = vld [vmem:[%s123 + $0xc0] sm:$0xff]
    %v473 = vld [vmem:[%s123 + $0xc8] sm:$0xff]
    %v474 = vld [vmem:[%s123 + $0xd8] sm:$0xff]
    %v475 = vld [vmem:[%s123 + $0xe0] sm:$0xff]
    %v476 = vld [vmem:[%s123 + $0xf0] sm:$0xff]
    %v477 = vld [vmem:[%s123 + $0xf8] sm:$0xff]
    %v478 = vld [vmem:[%s123 + $0x108] sm:$0xff]
    %v479 = vld [vmem:[%s123 + $0x110] sm:$0xff]
    %v480 = vld [vmem:[%s123 + $0x120] sm:$0xff]
    %v481 = vld [vmem:[%s123 + $0x128] sm:$0xff]
    %v482 = vld [vmem:[%s123 + $0x138] sm:$0xff]
    %v483 = vld [vmem:[%s123 + $0x140] sm:$0xff]
    %v484 = vld [vmem:[%s123 + $0x150] sm:$0xff]
    %v485 = vld [vmem:[%s123 + $0x158] sm:$0xff]
    %v486 = vld [vmem:[%s123 + $0x168] sm:$0xff]
    %v487 = vld [vmem:[%s123 + $0x170] sm:$0xff]
    %v488 = vstv %s159
    %v489 = vmul.f32 %v488, %v456
    %v490 = vmul.f32 %v488, %v457
    %v491 = vmul.f32 %v488, %v458
    %v492 = vmul.f32 %v488, %v459
    %v493 = vmul.f32 %v488, %v460
    %v494 = vmul.f32 %v488, %v461
    %v495 = vmul.f32 %v488, %v462
    %v496 = vmul.f32 %v488, %v463
    %v497 = vmul.f32 %v488, %v464
    %v498 = vmul.f32 %v488, %v465
    %v499 = vmul.f32 %v488, %v466
    %v500 = vmul.f32 %v488, %v467
    %v501 = vmul.f32 %v488, %v468
    %v502 = vmul.f32 %v488, %v469
    %v503 = vmul.f32 %v488, %v470
    %v504 = vmul.f32 %v488, %v471
    %v505 = vmul.f32 %v488, %v472
    %v506 = vmul.f32 %v488, %v473
    %v507 = vmul.f32 %v488, %v474
    %v508 = vmul.f32 %v488, %v475
    %v509 = vmul.f32 %v488, %v476
    %v510 = vmul.f32 %v488, %v477
    %v511 = vmul.f32 %v488, %v478
    %v512 = vmul.f32 %v488, %v479
    %v513 = vmul.f32 %v488, %v480
    %v514 = vmul.f32 %v488, %v481
    %v515 = vmul.f32 %v488, %v482
    %v516 = vmul.f32 %v488, %v483
    %v517 = vmul.f32 %v488, %v484
    %v518 = vmul.f32 %v488, %v485
    %v519 = vmul.f32 %v488, %v486
    %v520 = vmul.f32 %v488, %v487
    %v521 = vadd.f32 %v230, %v489
    %v522 = vadd.f32 %v231, %v490
    %v523 = vadd.f32 %v232, %v491
    %v524 = vadd.f32 %v233, %v492
    %v525 = vadd.f32 %v234, %v493
    %v526 = vadd.f32 %v235, %v494
    %v527 = vadd.f32 %v236, %v495
    %v528 = vadd.f32 %v237, %v496
    %v529 = vadd.f32 %v238, %v497
    %v530 = vadd.f32 %v239, %v498
    %v531 = vadd.f32 %v240, %v499
    %v532 = vadd.f32 %v241, %v500
    %v533 = vadd.f32 %v242, %v501
    %v534 = vadd.f32 %v243, %v502
    %v535 = vadd.f32 %v244, %v503
    %v536 = vadd.f32 %v245, %v504
    %v537 = vadd.f32 %v246, %v505
    %v538 = vadd.f32 %v247, %v506
    %v539 = vadd.f32 %v248, %v507
    %v540 = vadd.f32 %v249, %v508
    %v541 = vadd.f32 %v250, %v509
    %v542 = vadd.f32 %v251, %v510
    %v543 = vadd.f32 %v252, %v511
    %v544 = vadd.f32 %v253, %v512
    %v545 = vadd.f32 %v254, %v513
    %v546 = vadd.f32 %v255, %v514
    %v547 = vadd.f32 %v256, %v515
    %v548 = vadd.f32 %v257, %v516
    %v549 = vadd.f32 %v258, %v517
    %v550 = vadd.f32 %v259, %v518
    %v551 = vadd.f32 %v260, %v519
    %v552 = vadd.f32 %v261, %v520
    %v553 = vld [vmem:[%s123 + $0x1] sm:$0xff]
    %v554 = vld [vmem:[%s123 + $0x9] sm:$0xff]
    %v555 = vld [vmem:[%s123 + $0x19] sm:$0xff]
    %v556 = vld [vmem:[%s123 + $0x21] sm:$0xff]
    %v557 = vld [vmem:[%s123 + $0x31] sm:$0xff]
    %v558 = vld [vmem:[%s123 + $0x39] sm:$0xff]
    %v559 = vld [vmem:[%s123 + $0x49] sm:$0xff]
    %v560 = vld [vmem:[%s123 + $0x51] sm:$0xff]
    %v561 = vld [vmem:[%s123 + $0x61] sm:$0xff]
    %v562 = vld [vmem:[%s123 + $0x69] sm:$0xff]
    %v563 = vld [vmem:[%s123 + $0x79] sm:$0xff]
    %v564 = vld [vmem:[%s123 + $0x81] sm:$0xff]
    %v565 = vld [vmem:[%s123 + $0x91] sm:$0xff]
    %v566 = vld [vmem:[%s123 + $0x99] sm:$0xff]
    %v567 = vld [vmem:[%s123 + $0xa9] sm:$0xff]
    %v568 = vld [vmem:[%s123 + $0xb1] sm:$0xff]
    %v569 = vld [vmem:[%s123 + $0xc1] sm:$0xff]
    %v570 = vld [vmem:[%s123 + $0xc9] sm:$0xff]
    %v571 = vld [vmem:[%s123 + $0xd9] sm:$0xff]
    %v572 = vld [vmem:[%s123 + $0xe1] sm:$0xff]
    %v573 = vld [vmem:[%s123 + $0xf1] sm:$0xff]
    %v574 = vld [vmem:[%s123 + $0xf9] sm:$0xff]
    %v575 = vld [vmem:[%s123 + $0x109] sm:$0xff]
    %v576 = vld [vmem:[%s123 + $0x111] sm:$0xff]
    %v577 = vld [vmem:[%s123 + $0x121] sm:$0xff]
    %v578 = vld [vmem:[%s123 + $0x129] sm:$0xff]
    %v579 = vld [vmem:[%s123 + $0x139] sm:$0xff]
    %v580 = vld [vmem:[%s123 + $0x141] sm:$0xff]
    %v581 = vld [vmem:[%s123 + $0x151] sm:$0xff]
    %v582 = vld [vmem:[%s123 + $0x159] sm:$0xff]
    %v583 = vld [vmem:[%s123 + $0x169] sm:$0xff]
    %v584 = vld [vmem:[%s123 + $0x171] sm:$0xff]
    %v585 = vstv %s160
    %v586 = vmul.f32 %v585, %v553
    %v587 = vmul.f32 %v585, %v554
    %v588 = vmul.f32 %v585, %v555
    %v589 = vmul.f32 %v585, %v556
    %v590 = vmul.f32 %v585, %v557
    %v591 = vmul.f32 %v585, %v558
    %v592 = vmul.f32 %v585, %v559
    %v593 = vmul.f32 %v585, %v560
    %v594 = vmul.f32 %v585, %v561
    %v595 = vmul.f32 %v585, %v562
    %v596 = vmul.f32 %v585, %v563
    %v597 = vmul.f32 %v585, %v564
    %v598 = vmul.f32 %v585, %v565
    %v599 = vmul.f32 %v585, %v566
    %v600 = vmul.f32 %v585, %v567
    %v601 = vmul.f32 %v585, %v568
    %v602 = vmul.f32 %v585, %v569
    %v603 = vmul.f32 %v585, %v570
    %v604 = vmul.f32 %v585, %v571
    %v605 = vmul.f32 %v585, %v572
    %v606 = vmul.f32 %v585, %v573
    %v607 = vmul.f32 %v585, %v574
    %v608 = vmul.f32 %v585, %v575
    %v609 = vmul.f32 %v585, %v576
    %v610 = vmul.f32 %v585, %v577
    %v611 = vmul.f32 %v585, %v578
    %v612 = vmul.f32 %v585, %v579
    %v613 = vmul.f32 %v585, %v580
    %v614 = vmul.f32 %v585, %v581
    %v615 = vmul.f32 %v585, %v582
    %v616 = vmul.f32 %v585, %v583
    %v617 = vmul.f32 %v585, %v584
    %v618 = vadd.f32 %v327, %v586
    %v619 = vadd.f32 %v328, %v587
    %v620 = vadd.f32 %v329, %v588
    %v621 = vadd.f32 %v330, %v589
    %v622 = vadd.f32 %v331, %v590
    %v623 = vadd.f32 %v332, %v591
    %v624 = vadd.f32 %v333, %v592
    %v625 = vadd.f32 %v334, %v593
    %v626 = vadd.f32 %v335, %v594
    %v627 = vadd.f32 %v336, %v595
    %v628 = vadd.f32 %v337, %v596
    %v629 = vadd.f32 %v338, %v597
    %v630 = vadd.f32 %v339, %v598
    %v631 = vadd.f32 %v340, %v599
    %v632 = vadd.f32 %v341, %v600
    %v633 = vadd.f32 %v342, %v601
    %v634 = vadd.f32 %v343, %v602
    %v635 = vadd.f32 %v344, %v603
    %v636 = vadd.f32 %v345, %v604
    %v637 = vadd.f32 %v346, %v605
    %v638 = vadd.f32 %v347, %v606
    %v639 = vadd.f32 %v348, %v607
    %v640 = vadd.f32 %v349, %v608
    %v641 = vadd.f32 %v350, %v609
    %v642 = vadd.f32 %v351, %v610
    %v643 = vadd.f32 %v352, %v611
    %v644 = vadd.f32 %v353, %v612
    %v645 = vadd.f32 %v354, %v613
    %v646 = vadd.f32 %v355, %v614
    %v647 = vadd.f32 %v356, %v615
    %v648 = vadd.f32 %v357, %v616
    %v649 = vadd.f32 %v358, %v617
    %v650 = vld [vmem:[%s123 + $0x2] sm:$0xff]
    %v651 = vld [vmem:[%s123 + $0xa] sm:$0xff]
    %v652 = vld [vmem:[%s123 + $0x1a] sm:$0xff]
    %v653 = vld [vmem:[%s123 + $0x22] sm:$0xff]
    %v654 = vld [vmem:[%s123 + $0x32] sm:$0xff]
    %v655 = vld [vmem:[%s123 + $0x3a] sm:$0xff]
    %v656 = vld [vmem:[%s123 + $0x4a] sm:$0xff]
    %v657 = vld [vmem:[%s123 + $0x52] sm:$0xff]
    %v658 = vld [vmem:[%s123 + $0x62] sm:$0xff]
    %v659 = vld [vmem:[%s123 + $0x6a] sm:$0xff]
    %v660 = vld [vmem:[%s123 + $0x7a] sm:$0xff]
    %v661 = vld [vmem:[%s123 + $0x82] sm:$0xff]
    %v662 = vld [vmem:[%s123 + $0x92] sm:$0xff]
    %v663 = vld [vmem:[%s123 + $0x9a] sm:$0xff]
    %v664 = vld [vmem:[%s123 + $0xaa] sm:$0xff]
    %v665 = vld [vmem:[%s123 + $0xb2] sm:$0xff]
    %v666 = vld [vmem:[%s123 + $0xc2] sm:$0xff]
    %v667 = vld [vmem:[%s123 + $0xca] sm:$0xff]
    %v668 = vld [vmem:[%s123 + $0xda] sm:$0xff]
    %v669 = vld [vmem:[%s123 + $0xe2] sm:$0xff]
    %v670 = vld [vmem:[%s123 + $0xf2] sm:$0xff]
    %v671 = vld [vmem:[%s123 + $0xfa] sm:$0xff]
    %v672 = vld [vmem:[%s123 + $0x10a] sm:$0xff]
    %v673 = vld [vmem:[%s123 + $0x112] sm:$0xff]
    %v674 = vld [vmem:[%s123 + $0x122] sm:$0xff]
    %v675 = vld [vmem:[%s123 + $0x12a] sm:$0xff]
    %v676 = vld [vmem:[%s123 + $0x13a] sm:$0xff]
    %v677 = vld [vmem:[%s123 + $0x142] sm:$0xff]
    %v678 = vld [vmem:[%s123 + $0x152] sm:$0xff]
    %v679 = vld [vmem:[%s123 + $0x15a] sm:$0xff]
    %v680 = vld [vmem:[%s123 + $0x16a] sm:$0xff]
    %v681 = vld [vmem:[%s123 + $0x172] sm:$0xff]
    %v682 = vstv %s161
    %v683 = vmul.f32 %v682, %v650
    %v684 = vmul.f32 %v682, %v651
    %v685 = vmul.f32 %v682, %v652
    %v686 = vmul.f32 %v682, %v653
    %v687 = vmul.f32 %v682, %v654
    %v688 = vmul.f32 %v682, %v655
    %v689 = vmul.f32 %v682, %v656
    %v690 = vmul.f32 %v682, %v657
    %v691 = vmul.f32 %v682, %v658
    %v692 = vmul.f32 %v682, %v659
    %v693 = vmul.f32 %v682, %v660
    %v694 = vmul.f32 %v682, %v661
    %v695 = vmul.f32 %v682, %v662
    %v696 = vmul.f32 %v682, %v663
    %v697 = vmul.f32 %v682, %v664
    %v698 = vmul.f32 %v682, %v665
    %v699 = vmul.f32 %v682, %v666
    %v700 = vmul.f32 %v682, %v667
    %v701 = vmul.f32 %v682, %v668
    %v702 = vmul.f32 %v682, %v669
    %v703 = vmul.f32 %v682, %v670
    %v704 = vmul.f32 %v682, %v671
    %v705 = vmul.f32 %v682, %v672
    %v706 = vmul.f32 %v682, %v673
    %v707 = vmul.f32 %v682, %v674
    %v708 = vmul.f32 %v682, %v675
    %v709 = vmul.f32 %v682, %v676
    %v710 = vmul.f32 %v682, %v677
    %v711 = vmul.f32 %v682, %v678
    %v712 = vmul.f32 %v682, %v679
    %v713 = vmul.f32 %v682, %v680
    %v714 = vmul.f32 %v682, %v681
    %v715 = vadd.f32 %v424, %v683
    %v716 = vadd.f32 %v425, %v684
    %v717 = vadd.f32 %v426, %v685
    %v718 = vadd.f32 %v427, %v686
    %v719 = vadd.f32 %v428, %v687
    %v720 = vadd.f32 %v429, %v688
    %v721 = vadd.f32 %v430, %v689
    %v722 = vadd.f32 %v431, %v690
    %v723 = vadd.f32 %v432, %v691
    %v724 = vadd.f32 %v433, %v692
    %v725 = vadd.f32 %v434, %v693
    %v726 = vadd.f32 %v435, %v694
    %v727 = vadd.f32 %v436, %v695
    %v728 = vadd.f32 %v437, %v696
    %v729 = vadd.f32 %v438, %v697
    %v730 = vadd.f32 %v439, %v698
    %v731 = vadd.f32 %v440, %v699
    %v732 = vadd.f32 %v441, %v700
    %v733 = vadd.f32 %v442, %v701
    %v734 = vadd.f32 %v443, %v702
    %v735 = vadd.f32 %v444, %v703
    %v736 = vadd.f32 %v445, %v704
    %v737 = vadd.f32 %v446, %v705
    %v738 = vadd.f32 %v447, %v706
    %v739 = vadd.f32 %v448, %v707
    %v740 = vadd.f32 %v449, %v708
    %v741 = vadd.f32 %v450, %v709
    %v742 = vadd.f32 %v451, %v710
    %v743 = vadd.f32 %v452, %v711
    %v744 = vadd.f32 %v453, %v712
    %v745 = vadd.f32 %v454, %v713
    %v746 = vadd.f32 %v455, %v714
    %s747 = scalar_lea.vmem [#allocation2], 48
    %v748 = vld [vmem:[%s747] sm:$0xff]
    %v749 = vld [vmem:[%s747 + $0x8] sm:$0xff]
    %v750 = vld [vmem:[%s747 + $0x18] sm:$0xff]
    %v751 = vld [vmem:[%s747 + $0x20] sm:$0xff]
    %v752 = vld [vmem:[%s747 + $0x30] sm:$0xff]
    %v753 = vld [vmem:[%s747 + $0x38] sm:$0xff]
    %v754 = vld [vmem:[%s747 + $0x48] sm:$0xff]
    %v755 = vld [vmem:[%s747 + $0x50] sm:$0xff]
    %v756 = vld [vmem:[%s747 + $0x60] sm:$0xff]
    %v757 = vld [vmem:[%s747 + $0x68] sm:$0xff]
    %v758 = vld [vmem:[%s747 + $0x78] sm:$0xff]
    %v759 = vld [vmem:[%s747 + $0x80] sm:$0xff]
    %v760 = vld [vmem:[%s747 + $0x90] sm:$0xff]
    %v761 = vld [vmem:[%s747 + $0x98] sm:$0xff]
    %v762 = vld [vmem:[%s747 + $0xa8] sm:$0xff]
    %v763 = vld [vmem:[%s747 + $0xb0] sm:$0xff]
    %v764 = vld [vmem:[%s747 + $0xc0] sm:$0xff]
    %v765 = vld [vmem:[%s747 + $0xc8] sm:$0xff]
    %v766 = vld [vmem:[%s747 + $0xd8] sm:$0xff]
    %v767 = vld [vmem:[%s747 + $0xe0] sm:$0xff]
    %v768 = vld [vmem:[%s747 + $0xf0] sm:$0xff]
    %v769 = vld [vmem:[%s747 + $0xf8] sm:$0xff]
    %v770 = vld [vmem:[%s747 + $0x108] sm:$0xff]
    %v771 = vld [vmem:[%s747 + $0x110] sm:$0xff]
    %v772 = vld [vmem:[%s747 + $0x120] sm:$0xff]
    %v773 = vld [vmem:[%s747 + $0x128] sm:$0xff]
    %v774 = vld [vmem:[%s747 + $0x138] sm:$0xff]
    %v775 = vld [vmem:[%s747 + $0x140] sm:$0xff]
    %v776 = vld [vmem:[%s747 + $0x150] sm:$0xff]
    %v777 = vld [vmem:[%s747 + $0x158] sm:$0xff]
    %v778 = vld [vmem:[%s747 + $0x168] sm:$0xff]
    %v779 = vld [vmem:[%s747 + $0x170] sm:$0xff]
    %v780 = vstv %s162
    %v781 = vmul.f32 %v780, %v748
    %v782 = vmul.f32 %v780, %v749
    %v783 = vmul.f32 %v780, %v750
    %v784 = vmul.f32 %v780, %v751
    %v785 = vmul.f32 %v780, %v752
    %v786 = vmul.f32 %v780, %v753
    %v787 = vmul.f32 %v780, %v754
    %v788 = vmul.f32 %v780, %v755
    %v789 = vmul.f32 %v780, %v756
    %v790 = vmul.f32 %v780, %v757
    %v791 = vmul.f32 %v780, %v758
    %v792 = vmul.f32 %v780, %v759
    %v793 = vmul.f32 %v780, %v760
    %v794 = vmul.f32 %v780, %v761
    %v795 = vmul.f32 %v780, %v762
    %v796 = vmul.f32 %v780, %v763
    %v797 = vmul.f32 %v780, %v764
    %v798 = vmul.f32 %v780, %v765
    %v799 = vmul.f32 %v780, %v766
    %v800 = vmul.f32 %v780, %v767
    %v801 = vmul.f32 %v780, %v768
    %v802 = vmul.f32 %v780, %v769
    %v803 = vmul.f32 %v780, %v770
    %v804 = vmul.f32 %v780, %v771
    %v805 = vmul.f32 %v780, %v772
    %v806 = vmul.f32 %v780, %v773
    %v807 = vmul.f32 %v780, %v774
    %v808 = vmul.f32 %v780, %v775
    %v809 = vmul.f32 %v780, %v776
    %v810 = vmul.f32 %v780, %v777
    %v811 = vmul.f32 %v780, %v778
    %v812 = vmul.f32 %v780, %v779
    %v813 = vadd.f32 %v521, %v781
    %v814 = vadd.f32 %v522, %v782
    %v815 = vadd.f32 %v523, %v783
    %v816 = vadd.f32 %v524, %v784
    %v817 = vadd.f32 %v525, %v785
    %v818 = vadd.f32 %v526, %v786
    %v819 = vadd.f32 %v527, %v787
    %v820 = vadd.f32 %v528, %v788
    %v821 = vadd.f32 %v529, %v789
    %v822 = vadd.f32 %v530, %v790
    %v823 = vadd.f32 %v531, %v791
    %v824 = vadd.f32 %v532, %v792
    %v825 = vadd.f32 %v533, %v793
    %v826 = vadd.f32 %v534, %v794
    %v827 = vadd.f32 %v535, %v795
    %v828 = vadd.f32 %v536, %v796
    %v829 = vadd.f32 %v537, %v797
    %v830 = vadd.f32 %v538, %v798
    %v831 = vadd.f32 %v539, %v799
    %v832 = vadd.f32 %v540, %v800
    %v833 = vadd.f32 %v541, %v801
    %v834 = vadd.f32 %v542, %v802
    %v835 = vadd.f32 %v543, %v803
    %v836 = vadd.f32 %v544, %v804
    %v837 = vadd.f32 %v545, %v805
    %v838 = vadd.f32 %v546, %v806
    %v839 = vadd.f32 %v547, %v807
    %v840 = vadd.f32 %v548, %v808
    %v841 = vadd.f32 %v549, %v809
    %v842 = vadd.f32 %v550, %v810
    %v843 = vadd.f32 %v551, %v811
    %v844 = vadd.f32 %v552, %v812
    %v845 = vld [vmem:[%s747 + $0x1] sm:$0xff]
    %v846 = vld [vmem:[%s747 + $0x9] sm:$0xff]
    %v847 = vld [vmem:[%s747 + $0x19] sm:$0xff]
    %v848 = vld [vmem:[%s747 + $0x21] sm:$0xff]
    %v849 = vld [vmem:[%s747 + $0x31] sm:$0xff]
    %v850 = vld [vmem:[%s747 + $0x39] sm:$0xff]
    %v851 = vld [vmem:[%s747 + $0x49] sm:$0xff]
    %v852 = vld [vmem:[%s747 + $0x51] sm:$0xff]
    %v853 = vld [vmem:[%s747 + $0x61] sm:$0xff]
    %v854 = vld [vmem:[%s747 + $0x69] sm:$0xff]
    %v855 = vld [vmem:[%s747 + $0x79] sm:$0xff]
    %v856 = vld [vmem:[%s747 + $0x81] sm:$0xff]
    %v857 = vld [vmem:[%s747 + $0x91] sm:$0xff]
    %v858 = vld [vmem:[%s747 + $0x99] sm:$0xff]
    %v859 = vld [vmem:[%s747 + $0xa9] sm:$0xff]
    %v860 = vld [vmem:[%s747 + $0xb1] sm:$0xff]
    %v861 = vld [vmem:[%s747 + $0xc1] sm:$0xff]
    %v862 = vld [vmem:[%s747 + $0xc9] sm:$0xff]
    %v863 = vld [vmem:[%s747 + $0xd9] sm:$0xff]
    %v864 = vld [vmem:[%s747 + $0xe1] sm:$0xff]
    %v865 = vld [vmem:[%s747 + $0xf1] sm:$0xff]
    %v866 = vld [vmem:[%s747 + $0xf9] sm:$0xff]
    %v867 = vld [vmem:[%s747 + $0x109] sm:$0xff]
    %v868 = vld [vmem:[%s747 + $0x111] sm:$0xff]
    %v869 = vld [vmem:[%s747 + $0x121] sm:$0xff]
    %v870 = vld [vmem:[%s747 + $0x129] sm:$0xff]
    %v871 = vld [vmem:[%s747 + $0x139] sm:$0xff]
    %v872 = vld [vmem:[%s747 + $0x141] sm:$0xff]
    %v873 = vld [vmem:[%s747 + $0x151] sm:$0xff]
    %v874 = vld [vmem:[%s747 + $0x159] sm:$0xff]
    %v875 = vld [vmem:[%s747 + $0x169] sm:$0xff]
    %v876 = vld [vmem:[%s747 + $0x171] sm:$0xff]
    %v877 = vstv %s163
    %v878 = vmul.f32 %v877, %v845
    %v879 = vmul.f32 %v877, %v846
    %v880 = vmul.f32 %v877, %v847
    %v881 = vmul.f32 %v877, %v848
    %v882 = vmul.f32 %v877, %v849
    %v883 = vmul.f32 %v877, %v850
    %v884 = vmul.f32 %v877, %v851
    %v885 = vmul.f32 %v877, %v852
    %v886 = vmul.f32 %v877, %v853
    %v887 = vmul.f32 %v877, %v854
    %v888 = vmul.f32 %v877, %v855
    %v889 = vmul.f32 %v877, %v856
    %v890 = vmul.f32 %v877, %v857
    %v891 = vmul.f32 %v877, %v858
    %v892 = vmul.f32 %v877, %v859
    %v893 = vmul.f32 %v877, %v860
    %v894 = vmul.f32 %v877, %v861
    %v895 = vmul.f32 %v877, %v862
    %v896 = vmul.f32 %v877, %v863
    %v897 = vmul.f32 %v877, %v864
    %v898 = vmul.f32 %v877, %v865
    %v899 = vmul.f32 %v877, %v866
    %v900 = vmul.f32 %v877, %v867
    %v901 = vmul.f32 %v877, %v868
    %v902 = vmul.f32 %v877, %v869
    %v903 = vmul.f32 %v877, %v870
    %v904 = vmul.f32 %v877, %v871
    %v905 = vmul.f32 %v877, %v872
    %v906 = vmul.f32 %v877, %v873
    %v907 = vmul.f32 %v877, %v874
    %v908 = vmul.f32 %v877, %v875
    %v909 = vmul.f32 %v877, %v876
    %v910 = vadd.f32 %v618, %v878
    %v911 = vadd.f32 %v619, %v879
    %v912 = vadd.f32 %v620, %v880
    %v913 = vadd.f32 %v621, %v881
    %v914 = vadd.f32 %v622, %v882
    %v915 = vadd.f32 %v623, %v883
    %v916 = vadd.f32 %v624, %v884
    %v917 = vadd.f32 %v625, %v885
    %v918 = vadd.f32 %v626, %v886
    %v919 = vadd.f32 %v627, %v887
    %v920 = vadd.f32 %v628, %v888
    %v921 = vadd.f32 %v629, %v889
    %v922 = vadd.f32 %v630, %v890
    %v923 = vadd.f32 %v631, %v891
    %v924 = vadd.f32 %v632, %v892
    %v925 = vadd.f32 %v633, %v893
    %v926 = vadd.f32 %v634, %v894
    %v927 = vadd.f32 %v635, %v895
    %v928 = vadd.f32 %v636, %v896
    %v929 = vadd.f32 %v637, %v897
    %v930 = vadd.f32 %v638, %v898
    %v931 = vadd.f32 %v639, %v899
    %v932 = vadd.f32 %v640, %v900
    %v933 = vadd.f32 %v641, %v901
    %v934 = vadd.f32 %v642, %v902
    %v935 = vadd.f32 %v643, %v903
    %v936 = vadd.f32 %v644, %v904
    %v937 = vadd.f32 %v645, %v905
    %v938 = vadd.f32 %v646, %v906
    %v939 = vadd.f32 %v647, %v907
    %v940 = vadd.f32 %v648, %v908
    %v941 = vadd.f32 %v649, %v909
    %v942 = vld [vmem:[%s747 + $0x2] sm:$0xff]
    %v943 = vld [vmem:[%s747 + $0xa] sm:$0xff]
    %v944 = vld [vmem:[%s747 + $0x1a] sm:$0xff]
    %v945 = vld [vmem:[%s747 + $0x22] sm:$0xff]
    %v946 = vld [vmem:[%s747 + $0x32] sm:$0xff]
    %v947 = vld [vmem:[%s747 + $0x3a] sm:$0xff]
    %v948 = vld [vmem:[%s747 + $0x4a] sm:$0xff]
    %v949 = vld [vmem:[%s747 + $0x52] sm:$0xff]
    %v950 = vld [vmem:[%s747 + $0x62] sm:$0xff]
    %v951 = vld [vmem:[%s747 + $0x6a] sm:$0xff]
    %v952 = vld [vmem:[%s747 + $0x7a] sm:$0xff]
    %v953 = vld [vmem:[%s747 + $0x82] sm:$0xff]
    %v954 = vld [vmem:[%s747 + $0x92] sm:$0xff]
    %v955 = vld [vmem:[%s747 + $0x9a] sm:$0xff]
    %v956 = vld [vmem:[%s747 + $0xaa] sm:$0xff]
    %v957 = vld [vmem:[%s747 + $0xb2] sm:$0xff]
    %v958 = vld [vmem:[%s747 + $0xc2] sm:$0xff]
    %v959 = vld [vmem:[%s747 + $0xca] sm:$0xff]
    %v960 = vld [vmem:[%s747 + $0xda] sm:$0xff]
    %v961 = vld [vmem:[%s747 + $0xe2] sm:$0xff]
    %v962 = vld [vmem:[%s747 + $0xf2] sm:$0xff]
    %v963 = vld [vmem:[%s747 + $0xfa] sm:$0xff]
    %v964 = vld [vmem:[%s747 + $0x10a] sm:$0xff]
    %v965 = vld [vmem:[%s747 + $0x112] sm:$0xff]
    %v966 = vld [vmem:[%s747 + $0x122] sm:$0xff]
    %v967 = vld [vmem:[%s747 + $0x12a] sm:$0xff]
    %v968 = vld [vmem:[%s747 + $0x13a] sm:$0xff]
    %v969 = vld [vmem:[%s747 + $0x142] sm:$0xff]
    %v970 = vld [vmem:[%s747 + $0x152] sm:$0xff]
    %v971 = vld [vmem:[%s747 + $0x15a] sm:$0xff]
    %v972 = vld [vmem:[%s747 + $0x16a] sm:$0xff]
    %v973 = vld [vmem:[%s747 + $0x172] sm:$0xff]
    %v974 = vstv %s164
    %v975 = vmul.f32 %v974, %v942
    %v976 = vmul.f32 %v974, %v943
    %v977 = vmul.f32 %v974, %v944
    %v978 = vmul.f32 %v974, %v945
    %v979 = vmul.f32 %v974, %v946
    %v980 = vmul.f32 %v974, %v947
    %v981 = vmul.f32 %v974, %v948
    %v982 = vmul.f32 %v974, %v949
    %v983 = vmul.f32 %v974, %v950
    %v984 = vmul.f32 %v974, %v951
    %v985 = vmul.f32 %v974, %v952
    %v986 = vmul.f32 %v974, %v953
    %v987 = vmul.f32 %v974, %v954
    %v988 = vmul.f32 %v974, %v955
    %v989 = vmul.f32 %v974, %v956
    %v990 = vmul.f32 %v974, %v957
    %v991 = vmul.f32 %v974, %v958
    %v992 = vmul.f32 %v974, %v959
    %v993 = vmul.f32 %v974, %v960
    %v994 = vmul.f32 %v974, %v961
    %v995 = vmul.f32 %v974, %v962
    %v996 = vmul.f32 %v974, %v963
    %v997 = vmul.f32 %v974, %v964
    %v998 = vmul.f32 %v974, %v965
    %v999 = vmul.f32 %v974, %v966
    %v1000 = vmul.f32 %v974, %v967
    %v1001 = vmul.f32 %v974, %v968
    %v1002 = vmul.f32 %v974, %v969
    %v1003 = vmul.f32 %v974, %v970
    %v1004 = vmul.f32 %v974, %v971
    %v1005 = vmul.f32 %v974, %v972
    %v1006 = vmul.f32 %v974, %v973
    %v1007 = vadd.f32 %v715, %v975
    %v1008 = vadd.f32 %v716, %v976
    %v1009 = vadd.f32 %v717, %v977
    %v1010 = vadd.f32 %v718, %v978
    %v1011 = vadd.f32 %v719, %v979
    %v1012 = vadd.f32 %v720, %v980
    %v1013 = vadd.f32 %v721, %v981
    %v1014 = vadd.f32 %v722, %v982
    %v1015 = vadd.f32 %v723, %v983
    %v1016 = vadd.f32 %v724, %v984
    %v1017 = vadd.f32 %v725, %v985
    %v1018 = vadd.f32 %v726, %v986
    %v1019 = vadd.f32 %v727, %v987
    %v1020 = vadd.f32 %v728, %v988
    %v1021 = vadd.f32 %v729, %v989
    %v1022 = vadd.f32 %v730, %v990
    %v1023 = vadd.f32 %v731, %v991
    %v1024 = vadd.f32 %v732, %v992
    %v1025 = vadd.f32 %v733, %v993
    %v1026 = vadd.f32 %v734, %v994
    %v1027 = vadd.f32 %v735, %v995
    %v1028 = vadd.f32 %v736, %v996
    %v1029 = vadd.f32 %v737, %v997
    %v1030 = vadd.f32 %v738, %v998
    %v1031 = vadd.f32 %v739, %v999
    %v1032 = vadd.f32 %v740, %v1000
    %v1033 = vadd.f32 %v741, %v1001
    %v1034 = vadd.f32 %v742, %v1002
    %v1035 = vadd.f32 %v743, %v1003
    %v1036 = vadd.f32 %v744, %v1004
    %v1037 = vadd.f32 %v745, %v1005
    %v1038 = vadd.f32 %v746, %v1006
    %v1039 = vadd.f32 %v813, %v910
    %v1040 = vadd.f32 %v814, %v911
    %v1041 = vadd.f32 %v815, %v912
    %v1042 = vadd.f32 %v816, %v913
    %v1043 = vadd.f32 %v817, %v914
    %v1044 = vadd.f32 %v818, %v915
    %v1045 = vadd.f32 %v819, %v916
    %v1046 = vadd.f32 %v820, %v917
    %v1047 = vadd.f32 %v821, %v918
    %v1048 = vadd.f32 %v822, %v919
    %v1049 = vadd.f32 %v823, %v920
    %v1050 = vadd.f32 %v824, %v921
    %v1051 = vadd.f32 %v825, %v922
    %v1052 = vadd.f32 %v826, %v923
    %v1053 = vadd.f32 %v827, %v924
    %v1054 = vadd.f32 %v828, %v925
    %v1055 = vadd.f32 %v829, %v926
    %v1056 = vadd.f32 %v830, %v927
    %v1057 = vadd.f32 %v831, %v928
    %v1058 = vadd.f32 %v832, %v929
    %v1059 = vadd.f32 %v833, %v930
    %v1060 = vadd.f32 %v834, %v931
    %v1061 = vadd.f32 %v835, %v932
    %v1062 = vadd.f32 %v836, %v933
    %v1063 = vadd.f32 %v837, %v934
    %v1064 = vadd.f32 %v838, %v935
    %v1065 = vadd.f32 %v839, %v936
    %v1066 = vadd.f32 %v840, %v937
    %v1067 = vadd.f32 %v841, %v938
    %v1068 = vadd.f32 %v842, %v939
    %v1069 = vadd.f32 %v843, %v940
    %v1070 = vadd.f32 %v844, %v941
    %v1071 = vadd.f32 %v1039, %v1007
    %v1072 = vadd.f32 %v1040, %v1008
    %v1073 = vadd.f32 %v1041, %v1009
    %v1074 = vadd.f32 %v1042, %v1010
    %v1075 = vadd.f32 %v1043, %v1011
    %v1076 = vadd.f32 %v1044, %v1012
    %v1077 = vadd.f32 %v1045, %v1013
    %v1078 = vadd.f32 %v1046, %v1014
    %v1079 = vadd.f32 %v1047, %v1015
    %v1080 = vadd.f32 %v1048, %v1016
    %v1081 = vadd.f32 %v1049, %v1017
    %v1082 = vadd.f32 %v1050, %v1018
    %v1083 = vadd.f32 %v1051, %v1019
    %v1084 = vadd.f32 %v1052, %v1020
    %v1085 = vadd.f32 %v1053, %v1021
    %v1086 = vadd.f32 %v1054, %v1022
    %v1087 = vadd.f32 %v1055, %v1023
    %v1088 = vadd.f32 %v1056, %v1024
    %v1089 = vadd.f32 %v1057, %v1025
    %v1090 = vadd.f32 %v1058, %v1026
    %v1091 = vadd.f32 %v1059, %v1027
    %v1092 = vadd.f32 %v1060, %v1028
    %v1093 = vadd.f32 %v1061, %v1029
    %v1094 = vadd.f32 %v1062, %v1030
    %v1095 = vadd.f32 %v1063, %v1031
    %v1096 = vadd.f32 %v1064, %v1032
    %v1097 = vadd.f32 %v1065, %v1033
    %v1098 = vadd.f32 %v1066, %v1034
    %v1099 = vadd.f32 %v1067, %v1035
    %v1100 = vadd.f32 %v1068, %v1036
    %v1101 = vadd.f32 %v1069, %v1037
    %v1102 = vadd.f32 %v1070, %v1038
    %1103 = vst [vmem:[#allocation8] sm:$0xff] %v1071
    %1104 = vst [vmem:[#allocation8 + $0x8] sm:$0xff] %v1072
    %1105 = vst [vmem:[#allocation8 + $0x10] sm:$0xff] %v1073
    %1106 = vst [vmem:[#allocation8 + $0x18] sm:$0xff] %v1074
    %1107 = vst [vmem:[#allocation8 + $0x20] sm:$0xff] %v1075
    %1108 = vst [vmem:[#allocation8 + $0x28] sm:$0xff] %v1076
    %1109 = vst [vmem:[#allocation8 + $0x30] sm:$0xff] %v1077
    %1110 = vst [vmem:[#allocation8 + $0x38] sm:$0xff] %v1078
    %1111 = vst [vmem:[#allocation8 + $0x40] sm:$0xff] %v1079
    %1112 = vst [vmem:[#allocation8 + $0x48] sm:$0xff] %v1080
    %1113 = vst [vmem:[#allocation8 + $0x50] sm:$0xff] %v1081
    %1114 = vst [vmem:[#allocation8 + $0x58] sm:$0xff] %v1082
    %1115 = vst [vmem:[#allocation8 + $0x60] sm:$0xff] %v1083
    %1116 = vst [vmem:[#allocation8 + $0x68] sm:$0xff] %v1084
    %1117 = vst [vmem:[#allocation8 + $0x70] sm:$0xff] %v1085
    %1118 = vst [vmem:[#allocation8 + $0x78] sm:$0xff] %v1086
    %1119 = vst [vmem:[#allocation8 + $0x80] sm:$0xff] %v1087
    %1120 = vst [vmem:[#allocation8 + $0x88] sm:$0xff] %v1088
    %1121 = vst [vmem:[#allocation8 + $0x90] sm:$0xff] %v1089
    %1122 = vst [vmem:[#allocation8 + $0x98] sm:$0xff] %v1090
    %1123 = vst [vmem:[#allocation8 + $0xa0] sm:$0xff] %v1091
    %1124 = vst [vmem:[#allocation8 + $0xa8] sm:$0xff] %v1092
    %1125 = vst [vmem:[#allocation8 + $0xb0] sm:$0xff] %v1093
    %1126 = vst [vmem:[#allocation8 + $0xb8] sm:$0xff] %v1094
    %1127 = vst [vmem:[#allocation8 + $0xc0] sm:$0xff] %v1095
    %1128 = vst [vmem:[#allocation8 + $0xc8] sm:$0xff] %v1096
    %1129 = vst [vmem:[#allocation8 + $0xd0] sm:$0xff] %v1097
    %1130 = vst [vmem:[#allocation8 + $0xd8] sm:$0xff] %v1098
    %1131 = vst [vmem:[#allocation8 + $0xe0] sm:$0xff] %v1099
    %1132 = vst [vmem:[#allocation8 + $0xe8] sm:$0xff] %v1100
    %1133 = vst [vmem:[#allocation8 + $0xf0] sm:$0xff] %v1101
    %1134 = vst [vmem:[#allocation8 + $0xf8] sm:$0xff] %v1102
    // Predicated region
    $region18: #{tpu_custom_call.1} parent=1 // pred_check
      _
    $region19: #{tpu_custom_call.1} parent=1 // pred_check_branch
      %1136 = sbr.rel (0) target = $region21
    $region20: #{tpu_custom_call.1} parent=1 // pred_region
      %s1138 = ssub.s32 4096, 4096
      %1139 = vsyncadd [#allocation5], %s1138
      %s1140 = sshll.u32 [#allocation8], 4
      %s1141 = int_to_ptr.vmem [resolvable:$true] %s1140
      %1146 = dma.vmem_to_hbm [thread:$0]  %s1141, 4096, %s2, [#allocation5], 128, 128, 8
    $region21: #{tpu_custom_call.1} parent=1 // pred_fallthru
      _
    // Predicated region
    $region22: #{tpu_custom_call.1} parent=1 // pred_check
      _
    $region23: #{tpu_custom_call.1} parent=1 // pred_check_branch
      %1148 = sbr.rel (0) target = $region25
    $region24: #{tpu_custom_call.1} parent=1 // pred_region
      %1149 = dma.done [#allocation5], 4096
    $region25: #{tpu_custom_call.1} parent=1 // pred_fallthru
      _
    %1150 = vsyncpa [#allocation4], 1
    %1151 = vsyncpa [#allocation5], 1
    %1152 = vsyncpa [#allocation6], 1

</llo_original>
